<compile_context>
chip_gen: v7x
topology: tpu7x:2x2x1
jax: 0.10.0
libtpu: 0.0.40
codegen_flags: <defaults>
</compile_context>

<pallas_src>
import math
from functools import partial

import jax
import jax.numpy as jnp
from jax.experimental import pallas as pl
from jax.experimental.pallas import tpu as pltpu


def _round_up(a: int, b: int) -> int:
    return -(-a // b) * b


def _relation_crossing_kernel(x_ref, w_ref, ones_ref, o_ref, *,
                              negative_slope, rep, exact_scores):
    # x_ref   : (R, tR, L)  packed node features (L = heads_per_row * D lanes)
    # w_ref   : (rep, L)    per-row attention-weight pattern (period rep rows)
    # ones_ref: (L, L)      bf16 block-diagonal ones (one DxD block per head)
    # o_ref   : (tR, L)     relation-mixed output
    R, tR, L = x_ref.shape
    x = x_ref[...]

    # Weight multiply: broadcast the tiny (rep, L) pattern over the rows via a
    # free sublane-aligned reshape (rep is a multiple of 8).  x-sized products
    # stay in the input dtype (bf16 stays bf16 on v6e/v7x bf16 VALUs).
    w = w_ref[...].astype(x.dtype)
    xw = (x.reshape(R, tR // rep, rep, L) * w).reshape(R * tR, L)

    # Segmented lane reduce + broadcast on the MXU: xw @ block_diag(ones DxD)
    # sums each head's D lanes and replicates the score across those lanes in
    # a single matmul -- XLU stays idle, everything stays lane-dense.
    ones_bd = ones_ref[...]
    if exact_scores:
        # f32 inputs: manual bf16x3 operand split (same passes as
        # Precision.HIGH) with f32 accumulation -> f32-accurate scores.
        t1 = xw.astype(jnp.bfloat16)
        r1 = xw - t1.astype(jnp.float32)
        t2 = r1.astype(jnp.bfloat16)
        t3 = (r1 - t2.astype(jnp.float32)).astype(jnp.bfloat16)
        s = jnp.dot(t1, ones_bd, preferred_element_type=jnp.float32)
        s = s + jnp.dot(t2, ones_bd, preferred_element_type=jnp.float32)
        s = s + jnp.dot(t3, ones_bd, preferred_element_type=jnp.float32)
    else:
        # bf16 inputs: single MXU pass, f32 accumulation.
        s = jnp.dot(xw.astype(jnp.bfloat16), ones_bd,
                    preferred_element_type=jnp.float32)
    s = s.reshape(R, tR, L)

    # leaky_relu + softmax over the relation axis (leading dim => purely
    # elementwise VPU/EUP work over R vreg arrays, no cross-lane ops), in f32.
    s = jnp.where(s > 0, s, negative_slope * s)
    m = jnp.max(s, axis=0)                         # (tR, L)
    e = jnp.exp(s - m[None])                       # (R, tR, L)
    denom = jnp.sum(e, axis=0)                     # (tR, L)
    # exact reciprocal (approx=False) so the 1e-5 self-test tolerance holds
    attn = e * pl.reciprocal(denom, approx=False)[None]

    # Weighted sum over relations, f32 accumulate, cast on store (lane-dense
    # unmasked stores since L is a multiple of 128).
    o_ref[...] = jnp.sum(x.astype(jnp.float32) * attn, axis=0).astype(o_ref.dtype)


def relation_crossing(dsttype_node_features, attention_weight, *,
                      num_heads, out_feats, negative_slope=0.2,
                      vmem_budget_bytes=16 << 20):
    """dsttype_node_features: (R, N, H*D); attention_weight: (H, D).
    Returns (N, H*D) for R > 1, or the squeezed (N, H*D) tensor for R == 1."""
    R, N, HD = dsttype_node_features.shape
    H, D = num_heads, out_feats
    assert HD == H * D

    if R == 1:
        # PyTorch path: just squeeze(dim=0), no compute.
        return dsttype_node_features[0]

    # ---- lane-dense head packing: P heads per row so L = P*D % 128 == 0 ----
    P = H
    for p in range(1, H + 1):
        if H % p == 0 and (p * D) % 128 == 0:
            P = p
            break
    L = P * D                  # lane width (full last dim -> always legal block)
    G = H // P                 # head-groups (rows) per destination node
    total = N * G

    x3 = dsttype_node_features.reshape(R, total, L)        # contiguous (free)

    # Tiny per-row weight pattern: row (n, g) holds heads g*P .. g*P+P-1; the
    # pattern has period G, replicated to rep = lcm(8, G) rows so the in-kernel
    # broadcast reshape stays sublane-aligned.  (No (tile_rows, D) replication.)
    rep = (8 * G) // math.gcd(8, G)
    w_pat = jnp.tile(attention_weight.reshape(G, L), (rep // G, 1))

    # Block-diagonal ones (P blocks of D x D) for the MXU reduce+broadcast.
    lane = jnp.arange(L)
    ones_bd = ((lane[:, None] // D) == (lane[None, :] // D)).astype(jnp.bfloat16)

    # ---- generation-aware row tiling ---------------------------------------
    itemsize = jnp.dtype(x3.dtype).itemsize
    # double-buffered x + out blocks, plus ~3 live f32 x-sized temporaries
    per_row = (R + 1) * L * itemsize * 2 + 3 * R * L * 4
    tile_rows = max(rep, (vmem_budget_bytes // per_row) // rep * rep)
    if total > rep:
        # keep >= 2 grid steps when there is enough work so v7x's two
        # TensorCores can split the "parallel" row axis
        half = _round_up(max(rep, (total + 1) // 2), rep)
        tile_rows = min(tile_rows, half)
    tile_rows = min(tile_rows, _round_up(total, rep))

    padded = _round_up(total, tile_rows)
    if padded != total:
        # zero rows -> zero scores -> uniform softmax * zero features -> zero
        # output rows, sliced off below.
        x3 = jnp.pad(x3, ((0, 0), (0, padded - total), (0, 0)))

    # Explicit VMEM limit covering double-buffered blocks + f32 temporaries:
    # >= 32 MiB (raises v5e's 16 MiB scoped default), <= 48 MiB (safe under
    # v7x's 64 MiB physical VMEM).
    vmem_limit = int(min(48 << 20, max(32 << 20,
                                       per_row * tile_rows + (4 << 20))))

    out = pl.pallas_call(
        partial(_relation_crossing_kernel, negative_slope=negative_slope,
                rep=rep, exact_scores=(x3.dtype == jnp.float32)),
        out_shape=jax.ShapeDtypeStruct((padded, L), x3.dtype),
        grid_spec=pltpu.PrefetchScalarGridSpec(
            num_scalar_prefetch=0,
            grid=(padded // tile_rows,),
            in_specs=[
                pl.BlockSpec((R, tile_rows, L), lambda i: (0, i, 0)),
                pl.BlockSpec((rep, L), lambda i: (0, 0)),   # resident pattern
                pl.BlockSpec((L, L), lambda i: (0, 0)),     # resident ones
            ],
            out_specs=pl.BlockSpec((tile_rows, L), lambda i: (i, 0)),
        ),
        compiler_params=pltpu.CompilerParams(
            dimension_semantics=("parallel",),
            vmem_limit_bytes=vmem_limit),
    )(x3, w_pat, ones_bd)

    out = out[:total]
    return out.reshape(N, H * D)


def _relation_crossing_ref(x, w, num_heads, out_feats, negative_slope=0.2):
    """Pure-JAX reference mirroring the PyTorch forward (dropout = identity)."""
    R, N, _ = x.shape
    if R == 1:
        return x[0]
    x4 = x.reshape(R, -1, num_heads, out_feats).astype(jnp.float32)
    s = jnp.sum(x4 * w.astype(jnp.float32), axis=-1, keepdims=True)
    s = jnp.where(s > 0, s, negative_slope * s)
    a = jax.nn.softmax(s, axis=0)
    y = jnp.sum(x4 * a, axis=0).astype(x.dtype)
    return y.reshape(-1, num_heads * out_feats)


if __name__ == "__main__":
    negative_slope = 0.2
    key = jax.random.PRNGKey(0)

    # --- main test: R relations, N dst nodes, H heads, D hidden per head ---
    R, N, H, D = 3, 64, 4, 64
    kx, kw, kx2 = jax.random.split(key, 3)
    x = jax.random.normal(kx, (R, N, H * D), dtype=jnp.float32)
    w = jax.random.normal(kw, (H, D), dtype=jnp.float32) * 0.1

    out = relation_crossing(x, w, num_heads=H, out_feats=D,
                            negative_slope=negative_slope)
    out = jax.block_until_ready(out)
    ref = _relation_crossing_ref(x, w, H, D, negative_slope)
    assert out.shape == (N, H * D)
    assert jnp.allclose(out, ref, atol=1e-5, rtol=1e-5), "mismatch vs reference"

    # --- ragged N (exercises wrapper-side padding / non-multiple tiles) ---
    N2 = 45
    x2 = jax.random.normal(kx2, (R, N2, H * D), dtype=jnp.float32)
    out2 = relation_crossing(x2, w, num_heads=H, out_feats=D,
                             negative_slope=negative_slope)
    out2 = jax.block_until_ready(out2)
    ref2 = _relation_crossing_ref(x2, w, H, D, negative_slope)
    assert out2.shape == (N2, H * D)
    assert jnp.allclose(out2, ref2, atol=1e-5, rtol=1e-5), "ragged mismatch"

    # --- R == 1 squeeze path (no compute) ---
    out1 = relation_crossing(x[:1], w, num_heads=H, out_feats=D)
    out1 = jax.block_until_ready(out1)
    assert out1.shape == (N, H * D)
    assert jnp.allclose(out1, x[0])

    print("KERNEL_OK")
</pallas_src>

<mosaic_0001>
module attributes {stable_mosaic.version = 11 : i64} {
  func.func @_relation_crossing_kernel(%arg0: i32, %arg1: memref<3x64x128xf32, #tpu.memory_space<vmem>>, %arg2: memref<8x128xf32, #tpu.memory_space<vmem>>, %arg3: memref<128x128xbf16, #tpu.memory_space<vmem>>, %arg4: memref<64x128xf32, #tpu.memory_space<vmem>>) attributes {dimension_semantics = [#tpu.dimension_semantics<parallel>], iteration_bounds = array<i64: 2>, scalar_prefetch = 0 : i64, scratch_operands = 0 : i64, tpu.core_type = #tpu.core_type<tc>, window_params = [{transform_indices = @transform_0, window_bounds = array<i64: 3, 64, 128>}, {pipeline_mode = #tpu.pipeline_mode<synchronous>, transform_indices = @transform_1, window_bounds = array<i64: 8, 128>}, {pipeline_mode = #tpu.pipeline_mode<synchronous>, transform_indices = @transform_2, window_bounds = array<i64: 128, 128>}, {transform_indices = @transform_3, window_bounds = array<i64: 64, 128>}]} {
    %c0 = arith.constant 0 : index
    %c0_0 = arith.constant 0 : index
    %c0_1 = arith.constant 0 : index
    %0 = vector.load %arg1[%c0, %c0_0, %c0_1] : memref<3x64x128xf32, #tpu.memory_space<vmem>>, vector<3x64x128xf32>
    %c0_2 = arith.constant 0 : index
    %c0_3 = arith.constant 0 : index
    %1 = vector.load %arg2[%c0_2, %c0_3] : memref<8x128xf32, #tpu.memory_space<vmem>>, vector<8x128xf32>
    %2 = vector.shape_cast %0 : vector<3x64x128xf32> to vector<3x8x8x128xf32>
    %3 = vector.shape_cast %1 : vector<8x128xf32> to vector<1x1x8x128xf32>
    %4 = vector.broadcast %3 : vector<1x1x8x128xf32> to vector<3x8x8x128xf32>
    %5 = arith.mulf %2, %4 : vector<3x8x8x128xf32>
    %6 = vector.shape_cast %5 : vector<3x8x8x128xf32> to vector<192x128xf32>
    %c0_4 = arith.constant 0 : index
    %c0_5 = arith.constant 0 : index
    %7 = vector.load %arg3[%c0_4, %c0_5] : memref<128x128xbf16, #tpu.memory_space<vmem>>, vector<128x128xbf16>
    %8 = arith.truncf %6 : vector<192x128xf32> to vector<192x128xbf16>
    %9 = arith.extf %8 : vector<192x128xbf16> to vector<192x128xf32>
    %10 = arith.subf %6, %9 : vector<192x128xf32>
    %11 = arith.truncf %10 : vector<192x128xf32> to vector<192x128xbf16>
    %12 = arith.extf %11 : vector<192x128xbf16> to vector<192x128xf32>
    %13 = arith.subf %10, %12 : vector<192x128xf32>
    %14 = arith.truncf %13 : vector<192x128xf32> to vector<192x128xbf16>
    %cst = arith.constant dense<0.000000e+00> : vector<192x128xf32>
    %15 = tpu.matmul %8, %7, %cst {dimension_numbers = #tpu.dot_dimension_numbers<[1], [0], [0], [1], [0, 0, 1, 1], [], []>} : vector<192x128xbf16>, vector<128x128xbf16>, vector<192x128xf32> -> vector<192x128xf32>
    %cst_6 = arith.constant dense<0.000000e+00> : vector<192x128xf32>
    %16 = tpu.matmul %11, %7, %cst_6 {dimension_numbers = #tpu.dot_dimension_numbers<[1], [0], [0], [1], [0, 0, 1, 1], [], []>} : vector<192x128xbf16>, vector<128x128xbf16>, vector<192x128xf32> -> vector<192x128xf32>
    %17 = arith.addf %15, %16 : vector<192x128xf32>
    %cst_7 = arith.constant dense<0.000000e+00> : vector<192x128xf32>
    %18 = tpu.matmul %14, %7, %cst_7 {dimension_numbers = #tpu.dot_dimension_numbers<[1], [0], [0], [1], [0, 0, 1, 1], [], []>} : vector<192x128xbf16>, vector<128x128xbf16>, vector<192x128xf32> -> vector<192x128xf32>
    %19 = arith.addf %17, %18 : vector<192x128xf32>
    %20 = vector.shape_cast %19 : vector<192x128xf32> to vector<3x64x128xf32>
    %cst_8 = arith.constant 0.000000e+00 : f32
    %21 = vector.broadcast %cst_8 : f32 to vector<3x64x128xf32>
    %22 = arith.cmpf ogt, %20, %21 : vector<3x64x128xf32>
    %cst_9 = arith.constant 2.000000e-01 : f32
    %23 = vector.broadcast %cst_9 : f32 to vector<3x64x128xf32>
    %24 = arith.mulf %23, %20 : vector<3x64x128xf32>
    %25 = arith.select %22, %20, %24 : vector<3x64x128xi1>, vector<3x64x128xf32>
    %cst_10 = arith.constant dense<0xFF800000> : vector<64x128xf32>
    %26 = vector.multi_reduction <maximumf>, %25, %cst_10 [0] : vector<3x64x128xf32> to vector<64x128xf32>
    %27 = vector.shape_cast %26 : vector<64x128xf32> to vector<1x64x128xf32>
    %28 = vector.broadcast %27 : vector<1x64x128xf32> to vector<3x64x128xf32>
    %29 = arith.subf %25, %28 : vector<3x64x128xf32>
    %30 = math.exp %29 : vector<3x64x128xf32>
    %cst_11 = arith.constant dense<0.000000e+00> : vector<64x128xf32>
    %31 = vector.multi_reduction <add>, %30, %cst_11 [0] : vector<3x64x128xf32> to vector<64x128xf32>
    %32 = tpu.reciprocal %31 : vector<64x128xf32> -> vector<64x128xf32>
    %33 = vector.shape_cast %32 : vector<64x128xf32> to vector<1x64x128xf32>
    %34 = vector.broadcast %33 : vector<1x64x128xf32> to vector<3x64x128xf32>
    %35 = arith.mulf %30, %34 : vector<3x64x128xf32>
    %36 = arith.mulf %0, %35 : vector<3x64x128xf32>
    %cst_12 = arith.constant dense<0.000000e+00> : vector<64x128xf32>
    %37 = vector.multi_reduction <add>, %36, %cst_12 [0] : vector<3x64x128xf32> to vector<64x128xf32>
    %c0_13 = arith.constant 0 : index
    %c0_14 = arith.constant 0 : index
    %38 = vector.load %arg4[%c0_13, %c0_14] : memref<64x128xf32, #tpu.memory_space<vmem>>, vector<64x128xf32>
    tpu.vector_store %arg4[%c0_13, %c0_14], %37 {strides = array<i32>} : memref<64x128xf32, #tpu.memory_space<vmem>>, vector<64x128xf32>,
    return
  }
  func.func @transform_0(%arg0: i32) -> (i32, i32, i32) {
    %c0_i32 = arith.constant 0 : i32
    %c0_i32_0 = arith.constant 0 : i32
    %c0_i32_1 = arith.constant 0 : i32
    return %c0_i32, %arg0, %c0_i32_0 : i32, i32, i32
  }
  func.func @transform_1(%arg0: i32) -> (i32, i32) {
    %c0_i32 = arith.constant 0 : i32
    %c0_i32_0 = arith.constant 0 : i32
    %c0_i32_1 = arith.constant 0 : i32
    return %c0_i32, %c0_i32_0 : i32, i32
  }
  func.func @transform_2(%arg0: i32) -> (i32, i32) {
    %c0_i32 = arith.constant 0 : i32
    %c0_i32_0 = arith.constant 0 : i32
    %c0_i32_1 = arith.constant 0 : i32
    return %c0_i32, %c0_i32_0 : i32, i32
  }
  func.func @transform_3(%arg0: i32) -> (i32, i32) {
    %c0_i32 = arith.constant 0 : i32
    %c0_i32_0 = arith.constant 0 : i32
    return %arg0, %c0_i32 : i32, i32
  }
}

</mosaic_0001>

<llo_original>
// kernel: tpu_custom_call.1
$region0: #{tpu_custom_call.1}
  #allocation0 [shape = 'u32[]', space=smem, size = 0x4, offset = 0x4, fixed_abs, tag = 'smem constant byte address 0x4 - core index']
  #allocation1 [shape = 'u32[144,128]{1,0:T(1,128)}', space=vmem, size = 0x12000, scoped, tag = 'internal scratch']
  #allocation9 [shape = 's32[]', space=sflag, size = 0x4, offset = 0, fixed_abs, tag = 'sflag constant byte address 0x0 - dummy sync flag']
  %s0 = inlined_call_operand.hbm [shape: f32[3,128,128], index: 0, kind: input, shape index: {}]
  %s1 = inlined_call_operand.hbm [shape: f32[8,128], index: 1, kind: input, shape index: {}]
  %s2 = inlined_call_operand.hbm [shape: bf16[128,128], index: 2, kind: input, shape index: {}]
  %s3 = inlined_call_operand.hbm [shape: f32[128,128], index: 3, kind: output, shape index: {}]
  %s4 = sld [smem:[#allocation0]]
  $region57: #{tpu_custom_call.1} parent=0
    _
  %s6 = ssub.s32 1, %s4
  %s7 = scalar_select 0, %s6, %s4
  $region1: #{tpu_custom_call.1} parent=0
    #allocation2 [shape = 'u8[196608]{0}', space=vmem, size = 0x30000, scoped, tag = 'input window, operand 0']
    #allocation3 [shape = 's32[2]{0}', space=sflag, size = 0x8, scoped, tag = 'scoped memory for tpu_custom_call.1']
    #allocation4 [shape = 's32[2]{0}', space=sflag, size = 0x8, scoped, tag = 'scoped memory for tpu_custom_call.1']
    #allocation5 [shape = 'u8[4096]{0}', space=vmem, size = 0x1000, scoped, tag = 'input window, operand 1, single buffered']
    #allocation6 [shape = 's32[1]{0}', space=sflag, size = 0x4, scoped, tag = 'scoped memory for tpu_custom_call.1']
    #allocation7 [shape = 'u8[32768]{0}', space=vmem, size = 0x8000, scoped, tag = 'input window, operand 2, single buffered']
    #allocation8 [shape = 'u8[65536]{0}', space=vmem, size = 0x10000, scoped, tag = 'output window, operand 0']
    %8 = vsyncpa [#allocation3], 0
    %s9 = scalar_lea.sflag [#allocation3], 1
    %10 = vsyncpa %s9, 0
    %11 = vsyncpa [#allocation6], 0
    %12 = vsyncpa [#allocation4], 0
    %s13 = scalar_lea.sflag [#allocation4], 1
    %14 = vsyncpa %s13, 0
    loop: start=0, step=1, limit=4
    $region2: #{tpu_custom_call.1} parent=1 // loop_pre_header
      _
    $region3: #{tpu_custom_call.1} parent=1 // loop_header
      %s16 = sphi 0, %s20
      %p17 = scmp.ge.s32.totalorder %s16, 4
      %s26 = sphi 0, %s28
      %s29 = sphi 0, %s26
      %s30 = sphi 0, %s29
      %s46 = sphi 0, %s30
      %s50 = sphi 0, %s50
      %s52 = sphi 0, %s50
      %s53 = sphi 0, %s52
      %s67 = sphi 0, %s53
      %s71 = sphi 0, %s71
      %s73 = sphi 0, %s71
      %s74 = sphi 0, %s73
      %s88 = sphi 0, %s74
      %s94 = sphi 0, %s96
      %s97 = sphi 0, %s94
      %s98 = sphi 0, %s97
      %s114 = sphi 0, %s98
    $region4: #{tpu_custom_call.1} parent=1 // loop_header_branch
      %19 = sbr.rel (%p17) target = $region8
    $region5: #{tpu_custom_call.1} parent=1 // loop_body
      %s21 = ssub.s32 %s16, 1
      %s22 = ssub.s32 %s16, 2
      %s23 = sadd.s32 %s16, 1
      %s24 = ssub.s32 %s16, %s23
      %p25 = scmp.eq.s32.totalorder %s24, 0
      %s27 = sadd.s32 %s26, 1
      %s28 = scalar_select %p25, %s26, %s27
      %p31 = pneg %p25
      %p32 = scmp.eq.s32.totalorder %s16, 1
      %p33 = por %p31, %p32
      %p34 = scmp.ne.s32.totalorder %s26, %s29
      %p35 = scmp.eq.s32.totalorder %s16, 0
      %p36 = por %p34, %p35
      %p37 = scmp.ne.s32.totalorder %s26, %s29
      %p38 = scmp.eq.s32.totalorder %s21, 1
      %p39 = por %p37, %p38
      %p40 = scmp.ne.s32.totalorder %s29, %s30
      %p41 = scmp.eq.s32.totalorder %s21, 0
      %p42 = por %p40, %p41
      %p43 = scmp.ne.s32.totalorder %s29, %s30
      %p44 = scmp.eq.s32.totalorder %s22, 1
      %p45 = por %p43, %p44
      %p47 = scmp.ne.s32.totalorder %s30, %s46
      %p48 = scmp.eq.s32.totalorder %s22, 0
      %p49 = por %p47, %p48
      %s51 = sadd.s32 %s50, 1
      %p54 = scmp.eq.s32.totalorder %s16, 1
      %p55 = scmp.ne.s32.totalorder %s50, %s52
      %p56 = scmp.eq.s32.totalorder %s16, 0
      %p57 = por %p55, %p56
      %p58 = scmp.ne.s32.totalorder %s50, %s52
      %p59 = scmp.eq.s32.totalorder %s21, 1
      %p60 = por %p58, %p59
      %p61 = scmp.ne.s32.totalorder %s52, %s53
      %p62 = scmp.eq.s32.totalorder %s21, 0
      %p63 = por %p61, %p62
      %p64 = scmp.ne.s32.totalorder %s52, %s53
      %p65 = scmp.eq.s32.totalorder %s22, 1
      %p66 = por %p64, %p65
      %p68 = scmp.ne.s32.totalorder %s53, %s67
      %p69 = scmp.eq.s32.totalorder %s22, 0
      %p70 = por %p68, %p69
      %s72 = sadd.s32 %s71, 1
      %p75 = scmp.eq.s32.totalorder %s16, 1
      %p76 = scmp.ne.s32.totalorder %s71, %s73
      %p77 = scmp.eq.s32.totalorder %s16, 0
      %p78 = por %p76, %p77
      %p79 = scmp.ne.s32.totalorder %s71, %s73
      %p80 = scmp.eq.s32.totalorder %s21, 1
      %p81 = por %p79, %p80
      %p82 = scmp.ne.s32.totalorder %s73, %s74
      %p83 = scmp.eq.s32.totalorder %s21, 0
      %p84 = por %p82, %p83
      %p85 = scmp.ne.s32.totalorder %s73, %s74
      %p86 = scmp.eq.s32.totalorder %s22, 1
      %p87 = por %p85, %p86
      %p89 = scmp.ne.s32.totalorder %s74, %s88
      %p90 = scmp.eq.s32.totalorder %s22, 0
      %p91 = por %p89, %p90
      %s92 = ssub.s32 %s16, %s23
      %p93 = scmp.eq.s32.totalorder %s92, 0
      %s95 = sadd.s32 %s94, 1
      %s96 = scalar_select %p93, %s94, %s95
      %p99 = pneg %p93
      %p100 = scmp.eq.s32.totalorder %s16, 1
      %p101 = por %p99, %p100
      %p102 = scmp.ne.s32.totalorder %s94, %s97
      %p103 = scmp.eq.s32.totalorder %s16, 0
      %p104 = por %p102, %p103
      %p105 = scmp.ne.s32.totalorder %s94, %s97
      %p106 = scmp.eq.s32.totalorder %s21, 1
      %p107 = por %p105, %p106
      %p108 = scmp.ne.s32.totalorder %s97, %s98
      %p109 = scmp.eq.s32.totalorder %s21, 0
      %p110 = por %p108, %p109
      %p111 = scmp.ne.s32.totalorder %s97, %s98
      %p112 = scmp.eq.s32.totalorder %s22, 1
      %p113 = por %p111, %p112
      %p115 = scmp.ne.s32.totalorder %s98, %s114
      %p116 = scmp.eq.s32.totalorder %s22, 0
      %p117 = por %p115, %p116
      %p118 = scmp.le.s32.totalorder 1, %s16
      %p119 = scmp.lt.s32.totalorder %s16, 3
      %p120 = pnand %p118, %p119
      %p121 = pneg %p120
      // Predicated region
      $region9: #{tpu_custom_call.1} parent=5 // pred_check
        _
      $region10: #{tpu_custom_call.1} parent=5 // pred_check_branch
        %123 = sbr.rel (%p120) target = $region12
      $region11: #{tpu_custom_call.1} parent=5 // pred_region
        %s124 = ssub.s32 %s16, 1
        // Predicated region
        $region13: #{tpu_custom_call.1} parent=11 // pred_check
          %p125 = pneg %p63
        $region14: #{tpu_custom_call.1} parent=11 // pred_check_branch
          %127 = sbr.rel (%p125) target = $region16
        $region15: #{tpu_custom_call.1} parent=11 // pred_region
          %s129 = ssub.s32 128, 128
          %130 = vsyncadd [#allocation6], %s129
          %s132 = sshll.u32 [#allocation5], 4
          %s133 = int_to_ptr.vmem [resolvable:$true] %s132
          %135 = dma.hbm_to_vmem [thread:$0]  %s1, 128, %s133, [#allocation6]
        $region16: #{tpu_custom_call.1} parent=11 // pred_fallthru
          _
        // Predicated region
        $region17: #{tpu_custom_call.1} parent=11 // pred_check
          %p136 = pneg %p84
        $region18: #{tpu_custom_call.1} parent=11 // pred_check_branch
          %138 = sbr.rel (%p136) target = $region20
        $region19: #{tpu_custom_call.1} parent=11 // pred_region
          %s140 = ssub.s32 1024, 1024
          %141 = vsyncadd [#allocation6], %s140
          %s142 = sshll.u32 [#allocation7], 4
          %s143 = int_to_ptr.vmem [resolvable:$true] %s142
          %148 = dma.hbm_to_vmem [thread:$0]  %s2, 1024, %s143, [#allocation6], 64, 64, 4
        $region20: #{tpu_custom_call.1} parent=11 // pred_fallthru
          _
      $region12: #{tpu_custom_call.1} parent=5 // pred_fallthru
        _
      %p149 = scmp.lt.s32.totalorder %s16, 2
      // Predicated region
      $region21: #{tpu_custom_call.1} parent=5 // pred_check
        %p150 = pneg %p149
      $region22: #{tpu_custom_call.1} parent=5 // pred_check_branch
        %152 = sbr.rel (%p150) target = $region24
      $region23: #{tpu_custom_call.1} parent=5 // pred_region
        // Predicated region
        $region25: #{tpu_custom_call.1} parent=23 // pred_check
          %p153 = pneg %p36
        $region26: #{tpu_custom_call.1} parent=23 // pred_check_branch
          %155 = sbr.rel (%p153) target = $region28
        $region27: #{tpu_custom_call.1} parent=23 // pred_region
          #allocation10 [shape = 'u32[6]{0}', space=smem, size = 0x18, scoped, tag = 'DMA stride descriptor']
          %s156 = sand.u32 %s26, 1
          %s157 = scalar_lea.sflag [#allocation3], %s156
          %s158 = sand.u32 %s26, 1
          %s159 = smul.addr %s158, 192
          %s160 = scalar_lea.vmem [#allocation2], %s159
          %s161 = smul.u32 8, %s16
          %s163 = ssub.s32 3072, 3072
          %164 = vsyncadd %s157, %s163
          %s165 = smul.addr %s161, 128
          %s166 = scalar_lea.hbm %s0, %s165
          %s168 = sshll.u32 1, 14
          %s169 = sxor.u32 4294967295, %s168
          %s171 = sld [smem:[#allocation0]]
          %s172 = sadd.s32 2, %s171
          %s174 = sshll.u32 7, 26
          %s175 = sxor.u32 4294967295, %s174
          %s176 = sand.u32 0, %s175
          %s177 = sshll.u32 %s172, 26
          %s178 = sor.u32 %s176, %s177
          %s179 = sshll.u32 %s160, 4
          %s180 = int_to_ptr.vmem [resolvable:$true] %s179
          %186 = sst [smem:[#allocation10]] 2048
          %s187 = scalar_lea.smem [#allocation10], 1
          %188 = sst [smem:[%s187]] 1024
          %s189 = scalar_lea.smem [#allocation10], 2
          %190 = sst [smem:[%s189]] 8
          %s191 = scalar_lea.smem [#allocation10], 3
          %192 = sst [smem:[%s191]] 128
          %s193 = scalar_lea.smem [#allocation10], 4
          %194 = sst [smem:[%s193]] 128
          %s195 = scalar_lea.smem [#allocation10], 5
          %196 = sst [smem:[%s195]] 8
          %198 = dma.general %s166, 3072, %s180, %s157, [#allocation9], [#allocation10], %s178, 0
        $region28: #{tpu_custom_call.1} parent=23 // pred_fallthru
          _
      $region24: #{tpu_custom_call.1} parent=5 // pred_fallthru
        _
      %p199 = scmp.le.s32.totalorder 1, %s16
      %p200 = scmp.lt.s32.totalorder %s16, 3
      %p201 = pnand %p199, %p200
      %p202 = pneg %p201
      // Predicated region
      $region29: #{tpu_custom_call.1} parent=5 // pred_check
        _
      $region30: #{tpu_custom_call.1} parent=5 // pred_check_branch
        %204 = sbr.rel (%p201) target = $region32
      $region31: #{tpu_custom_call.1} parent=5 // pred_region
        %s205 = ssub.s32 %s16, 1
        %s206 = sand.u32 %s29, 1
        %s207 = scalar_lea.sflag [#allocation3], %s206
        %s208 = sand.u32 %s29, 1
        %s209 = smul.addr %s208, 192
        %s210 = scalar_lea.vmem [#allocation2], %s209
        // Predicated region
        $region33: #{tpu_custom_call.1} parent=31 // pred_check
          %p211 = pneg %p42
        $region34: #{tpu_custom_call.1} parent=31 // pred_check_branch
          %213 = sbr.rel (%p211) target = $region36
        $region35: #{tpu_custom_call.1} parent=31 // pred_region
          %214 = dma.done %s207, 3072
        $region36: #{tpu_custom_call.1} parent=31 // pred_fallthru
          _
        // Predicated region
        $region37: #{tpu_custom_call.1} parent=31 // pred_check
          %p215 = pneg %p63
        $region38: #{tpu_custom_call.1} parent=31 // pred_check_branch
          %217 = sbr.rel (%p215) target = $region40
        $region39: #{tpu_custom_call.1} parent=31 // pred_region
          %218 = dma.done [#allocation6], 128
        $region40: #{tpu_custom_call.1} parent=31 // pred_fallthru
          _
        // Predicated region
        $region41: #{tpu_custom_call.1} parent=31 // pred_check
          %p219 = pneg %p84
        $region42: #{tpu_custom_call.1} parent=31 // pred_check_branch
          %221 = sbr.rel (%p219) target = $region44
        $region43: #{tpu_custom_call.1} parent=31 // pred_region
          %222 = dma.done [#allocation6], 1024
        $region44: #{tpu_custom_call.1} parent=31 // pred_fallthru
          _
        %s223 = sand.u32 %s29, 1
        %s224 = scalar_lea.sflag [#allocation3], %s223
        %s225 = sand.u32 %s29, 1
        %s226 = smul.addr %s225, 192
        %s227 = scalar_lea.vmem [#allocation2], %s226
        %p228 = pneg %p42
        %p229 = pneg %p39
        %p230 = pneg %p63
        %p231 = pneg %p60
        %p232 = pneg %p84
        %p233 = pneg %p81
        %p234 = pneg %p110
        %p235 = pneg %p107
        %s236 = sand.u32 %s97, 1
        %s237 = scalar_lea.sflag [#allocation4], %s236
        %s238 = sand.u32 %s97, 1
        %s239 = smul.addr %s238, 64
        %s240 = scalar_lea.vmem [#allocation8], %s239
        %s241 = smul.u32 8, %s21
        %s242 = smul.u32 8, %s21
        %v244 = vld [vmem:[%s210] sm:$0xff]
        %v245 = vld [vmem:[%s210 + $0x8] sm:$0xff]
        %v246 = vld [vmem:[%s210 + $0x10] sm:$0xff]
        %v247 = vld [vmem:[%s210 + $0x18] sm:$0xff]
        %v248 = vld [vmem:[%s210 + $0x20] sm:$0xff]
        %v249 = vld [vmem:[%s210 + $0x28] sm:$0xff]
        %v250 = vld [vmem:[%s210 + $0x30] sm:$0xff]
        %v251 = vld [vmem:[%s210 + $0x38] sm:$0xff]
        %v252 = vld [vmem:[%s210 + $0x40] sm:$0xff]
        %v253 = vld [vmem:[%s210 + $0x48] sm:$0xff]
        %v254 = vld [vmem:[%s210 + $0x50] sm:$0xff]
        %v255 = vld [vmem:[%s210 + $0x58] sm:$0xff]
        %v256 = vld [vmem:[%s210 + $0x60] sm:$0xff]
        %v257 = vld [vmem:[%s210 + $0x68] sm:$0xff]
        %v258 = vld [vmem:[%s210 + $0x70] sm:$0xff]
        %v259 = vld [vmem:[%s210 + $0x78] sm:$0xff]
        %v260 = vld [vmem:[%s210 + $0x80] sm:$0xff]
        %v261 = vld [vmem:[%s210 + $0x88] sm:$0xff]
        %v262 = vld [vmem:[%s210 + $0x90] sm:$0xff]
        %v263 = vld [vmem:[%s210 + $0x98] sm:$0xff]
        %v264 = vld [vmem:[%s210 + $0xa0] sm:$0xff]
        %v265 = vld [vmem:[%s210 + $0xa8] sm:$0xff]
        %v266 = vld [vmem:[%s210 + $0xb0] sm:$0xff]
        %v267 = vld [vmem:[%s210 + $0xb8] sm:$0xff]
        %v268 = vld [vmem:[#allocation5] sm:$0xff]
        %v269 = vmul.f32 %v244, %v268
        %v270 = vmul.f32 %v245, %v268
        %v271 = vmul.f32 %v246, %v268
        %v272 = vmul.f32 %v247, %v268
        %v273 = vmul.f32 %v248, %v268
        %v274 = vmul.f32 %v249, %v268
        %v275 = vmul.f32 %v250, %v268
        %v276 = vmul.f32 %v251, %v268
        %v277 = vmul.f32 %v252, %v268
        %v278 = vmul.f32 %v253, %v268
        %v279 = vmul.f32 %v254, %v268
        %v280 = vmul.f32 %v255, %v268
        %v281 = vmul.f32 %v256, %v268
        %v282 = vmul.f32 %v257, %v268
        %v283 = vmul.f32 %v258, %v268
        %v284 = vmul.f32 %v259, %v268
        %v285 = vmul.f32 %v260, %v268
        %v286 = vmul.f32 %v261, %v268
        %v287 = vmul.f32 %v262, %v268
        %v288 = vmul.f32 %v263, %v268
        %v289 = vmul.f32 %v264, %v268
        %v290 = vmul.f32 %v265, %v268
        %v291 = vmul.f32 %v266, %v268
        %v292 = vmul.f32 %v267, %v268
        %v293 = vld [vmem:[#allocation7] sm:$0xf]
        %v294 = vld [vmem:[#allocation7 + $0x4] sm:$0xf]
        %v295 = vld [vmem:[#allocation7 + $0x8] sm:$0xf]
        %v296 = vld [vmem:[#allocation7 + $0xc] sm:$0xf]
        %v297 = vld [vmem:[#allocation7 + $0x10] sm:$0xf]
        %v298 = vld [vmem:[#allocation7 + $0x14] sm:$0xf]
        %v299 = vld [vmem:[#allocation7 + $0x18] sm:$0xf]
        %v300 = vld [vmem:[#allocation7 + $0x1c] sm:$0xf]
        %v301 = vld [vmem:[#allocation7 + $0x20] sm:$0xf]
        %v302 = vld [vmem:[#allocation7 + $0x24] sm:$0xf]
        %v303 = vld [vmem:[#allocation7 + $0x28] sm:$0xf]
        %v304 = vld [vmem:[#allocation7 + $0x2c] sm:$0xf]
        %v305 = vld [vmem:[#allocation7 + $0x30] sm:$0xf]
        %v306 = vld [vmem:[#allocation7 + $0x34] sm:$0xf]
        %v307 = vld [vmem:[#allocation7 + $0x38] sm:$0xf]
        %v308 = vld [vmem:[#allocation7 + $0x3c] sm:$0xf]
        %v309 = vpack.c.bf16 %v270, %v269
        %v310 = vpack.c.bf16 %v272, %v271
        %v311 = vpack.c.bf16 %v274, %v273
        %v312 = vpack.c.bf16 %v276, %v275
        %v313 = vpack.c.bf16 %v278, %v277
        %v314 = vpack.c.bf16 %v280, %v279
        %v315 = vpack.c.bf16 %v282, %v281
        %v316 = vpack.c.bf16 %v284, %v283
        %v317 = vpack.c.bf16 %v286, %v285
        %v318 = vpack.c.bf16 %v288, %v287
        %v319 = vpack.c.bf16 %v290, %v289
        %v320 = vpack.c.bf16 %v292, %v291
        %v321 = vunpack.c.l.bf16 %v309
        %v322 = vunpack.c.h.bf16 %v309
        %v323 = vunpack.c.l.bf16 %v310
        %v324 = vunpack.c.h.bf16 %v310
        %v325 = vunpack.c.l.bf16 %v311
        %v326 = vunpack.c.h.bf16 %v311
        %v327 = vunpack.c.l.bf16 %v312
        %v328 = vunpack.c.h.bf16 %v312
        %v329 = vunpack.c.l.bf16 %v313
        %v330 = vunpack.c.h.bf16 %v313
        %v331 = vunpack.c.l.bf16 %v314
        %v332 = vunpack.c.h.bf16 %v314
        %v333 = vunpack.c.l.bf16 %v315
        %v334 = vunpack.c.h.bf16 %v315
        %v335 = vunpack.c.l.bf16 %v316
        %v336 = vunpack.c.h.bf16 %v316
        %v337 = vunpack.c.l.bf16 %v317
        %v338 = vunpack.c.h.bf16 %v317
        %v339 = vunpack.c.l.bf16 %v318
        %v340 = vunpack.c.h.bf16 %v318
        %v341 = vunpack.c.l.bf16 %v319
        %v342 = vunpack.c.h.bf16 %v319
        %v343 = vunpack.c.l.bf16 %v320
        %v344 = vunpack.c.h.bf16 %v320
        %v345 = vsub.f32 %v269, %v321
        %v346 = vsub.f32 %v270, %v322
        %v347 = vsub.f32 %v271, %v323
        %v348 = vsub.f32 %v272, %v324
        %v349 = vsub.f32 %v273, %v325
        %v350 = vsub.f32 %v274, %v326
        %v351 = vsub.f32 %v275, %v327
        %v352 = vsub.f32 %v276, %v328
        %v353 = vsub.f32 %v277, %v329
        %v354 = vsub.f32 %v278, %v330
        %v355 = vsub.f32 %v279, %v331
        %v356 = vsub.f32 %v280, %v332
        %v357 = vsub.f32 %v281, %v333
        %v358 = vsub.f32 %v282, %v334
        %v359 = vsub.f32 %v283, %v335
        %v360 = vsub.f32 %v284, %v336
        %v361 = vsub.f32 %v285, %v337
        %v362 = vsub.f32 %v286, %v338
        %v363 = vsub.f32 %v287, %v339
        %v364 = vsub.f32 %v288, %v340
        %v365 = vsub.f32 %v289, %v341
        %v366 = vsub.f32 %v290, %v342
        %v367 = vsub.f32 %v291, %v343
        %v368 = vsub.f32 %v292, %v344
        %v369 = vpack.c.bf16 %v346, %v345
        %v370 = vpack.c.bf16 %v348, %v347
        %v371 = vpack.c.bf16 %v350, %v349
        %v372 = vpack.c.bf16 %v352, %v351
        %v373 = vpack.c.bf16 %v354, %v353
        %v374 = vpack.c.bf16 %v356, %v355
        %v375 = vpack.c.bf16 %v358, %v357
        %v376 = vpack.c.bf16 %v360, %v359
        %v377 = vpack.c.bf16 %v362, %v361
        %v378 = vpack.c.bf16 %v364, %v363
        %v379 = vpack.c.bf16 %v366, %v365
        %v380 = vpack.c.bf16 %v368, %v367
        %v381 = vunpack.c.l.bf16 %v369
        %v382 = vunpack.c.h.bf16 %v369
        %v383 = vunpack.c.l.bf16 %v370
        %v384 = vunpack.c.h.bf16 %v370
        %v385 = vunpack.c.l.bf16 %v371
        %v386 = vunpack.c.h.bf16 %v371
        %v387 = vunpack.c.l.bf16 %v372
        %v388 = vunpack.c.h.bf16 %v372
        %v389 = vunpack.c.l.bf16 %v373
        %v390 = vunpack.c.h.bf16 %v373
        %v391 = vunpack.c.l.bf16 %v374
        %v392 = vunpack.c.h.bf16 %v374
        %v393 = vunpack.c.l.bf16 %v375
        %v394 = vunpack.c.h.bf16 %v375
        %v395 = vunpack.c.l.bf16 %v376
        %v396 = vunpack.c.h.bf16 %v376
        %v397 = vunpack.c.l.bf16 %v377
        %v398 = vunpack.c.h.bf16 %v377
        %v399 = vunpack.c.l.bf16 %v378
        %v400 = vunpack.c.h.bf16 %v378
        %v401 = vunpack.c.l.bf16 %v379
        %v402 = vunpack.c.h.bf16 %v379
        %v403 = vunpack.c.l.bf16 %v380
        %v404 = vunpack.c.h.bf16 %v380
        %v405 = vsub.f32 %v345, %v381
        %v406 = vsub.f32 %v346, %v382
        %v407 = vsub.f32 %v347, %v383
        %v408 = vsub.f32 %v348, %v384
        %v409 = vsub.f32 %v349, %v385
        %v410 = vsub.f32 %v350, %v386
        %v411 = vsub.f32 %v351, %v387
        %v412 = vsub.f32 %v352, %v388
        %v413 = vsub.f32 %v353, %v389
        %v414 = vsub.f32 %v354, %v390
        %v415 = vsub.f32 %v355, %v391
        %v416 = vsub.f32 %v356, %v392
        %v417 = vsub.f32 %v357, %v393
        %v418 = vsub.f32 %v358, %v394
        %v419 = vsub.f32 %v359, %v395
        %v420 = vsub.f32 %v360, %v396
        %v421 = vsub.f32 %v361, %v397
        %v422 = vsub.f32 %v362, %v398
        %v423 = vsub.f32 %v363, %v399
        %v424 = vsub.f32 %v364, %v400
        %v425 = vsub.f32 %v365, %v401
        %v426 = vsub.f32 %v366, %v402
        %v427 = vsub.f32 %v367, %v403
        %v428 = vsub.f32 %v368, %v404
        %v429 = vpack.c.bf16 %v406, %v405
        %v430 = vpack.c.bf16 %v408, %v407
        %v431 = vpack.c.bf16 %v410, %v409
        %v432 = vpack.c.bf16 %v412, %v411
        %v433 = vpack.c.bf16 %v414, %v413
        %v434 = vpack.c.bf16 %v416, %v415
        %v435 = vpack.c.bf16 %v418, %v417
        %v436 = vpack.c.bf16 %v420, %v419
        %v437 = vpack.c.bf16 %v422, %v421
        %v438 = vpack.c.bf16 %v424, %v423
        %v439 = vpack.c.bf16 %v426, %v425
        %v440 = vpack.c.bf16 %v428, %v427
        %v457 = vunpack.c.l.b16 %v293
        %v458 = vunpack.c.l.b16 %v294
        %v459 = vunpack.c.l.b16 %v295
        %v460 = vunpack.c.l.b16 %v296
        %v461 = vunpack.c.l.b16 %v297
        %v462 = vunpack.c.l.b16 %v298
        %v463 = vunpack.c.l.b16 %v299
        %v464 = vunpack.c.l.b16 %v300
        %v465 = vunpack.c.l.b16 %v301
        %v466 = vunpack.c.l.b16 %v302
        %v467 = vunpack.c.l.b16 %v303
        %v468 = vunpack.c.l.b16 %v304
        %v469 = vunpack.c.l.b16 %v305
        %v470 = vunpack.c.l.b16 %v306
        %v471 = vunpack.c.l.b16 %v307
        %v472 = vunpack.c.l.b16 %v308
        %v473 = vpack.c.b16 %v458, %v457
        %v474 = vpack.c.b16 %v460, %v459
        %v475 = vpack.c.b16 %v462, %v461
        %v476 = vpack.c.b16 %v464, %v463
        %v477 = vpack.c.b16 %v466, %v465
        %v478 = vpack.c.b16 %v468, %v467
        %v479 = vpack.c.b16 %v470, %v469
        %v480 = vpack.c.b16 %v472, %v471
        %489 = vmatprep.subr.bf16.mxu0 0
        %490 = vmatpush1.bf16.msra.mxu0 %v473
        %491 = vmatprep.subr.bf16.mxu0 0
        %492 = vmatpush1.bf16.msra.mxu0 %v474
        %493 = vmatprep.subr.bf16.mxu0 0
        %494 = vmatpush1.bf16.msra.mxu0 %v475
        %495 = vmatprep.subr.bf16.mxu0 0
        %496 = vmatpush1.bf16.msra.mxu0 %v476
        %497 = vmatprep.subr.bf16.mxu0 0
        %498 = vmatpush1.bf16.msra.mxu0 %v477
        %499 = vmatprep.subr.bf16.mxu0 0
        %500 = vmatpush1.bf16.msra.mxu0 %v478
        %501 = vmatprep.subr.bf16.mxu0 0
        %502 = vmatpush1.bf16.msra.mxu0 %v479
        %503 = vmatprep.subr.bf16.mxu0 0
        %504 = vmatpush1.bf16.msra.mxu0 %v480
        %505 = vmatprep.subr.bf16.mxu0 0
        %506 = vmatpush1.bf16.msra.mxu0 0
        %507 = vmatprep.subr.bf16.mxu0 0
        %508 = vmatpush1.bf16.msra.mxu0 0
        %509 = vmatprep.subr.bf16.mxu0 0
        %510 = vmatpush1.bf16.msra.mxu0 0
        %511 = vmatprep.subr.bf16.mxu0 0
        %512 = vmatpush1.bf16.msra.mxu0 0
        %513 = vmatprep.subr.bf16.mxu0 0
        %514 = vmatpush1.bf16.msra.mxu0 0
        %515 = vmatprep.subr.bf16.mxu0 0
        %516 = vmatpush1.bf16.msra.mxu0 0
        %517 = vmatprep.subr.bf16.mxu0 0
        %518 = vmatpush1.bf16.msra.mxu0 0
        %519 = vmatprep.subr.bf16.mxu0 0
        %520 = vmatpush1.bf16.msra.mxu0 0
        %521 = vmatprep.mubr.bf16.mxu0 0
        %522 = vmatmul.mubr.bf16.gmra.mrb[0].mxu0 %v369
        %v523 = vpop.f32.mrb[0].mxu0
        %v524 = vadd.f32 0.0, %v523
        %v525 = vpop.f32.mrb[0].mxu0
        %v526 = vpop.f32.mrb[0].mxu0
        %v527 = vadd.f32 0.0, %v526
        %v528 = vpop.f32.mrb[0].mxu0
        %529 = vmatprep.mubr.bf16.mxu0 0
        %530 = vmatmul.mubr.bf16.gmra.mrb[0].mxu0 %v370
        %v531 = vpop.f32.mrb[0].mxu0
        %v532 = vadd.f32 0.0, %v531
        %v533 = vpop.f32.mrb[0].mxu0
        %v534 = vpop.f32.mrb[0].mxu0
        %v535 = vadd.f32 0.0, %v534
        %v536 = vpop.f32.mrb[0].mxu0
        %537 = vmatprep.mubr.bf16.mxu0 0
        %538 = vmatmul.mubr.bf16.gmra.mrb[0].mxu0 %v371
        %v539 = vpop.f32.mrb[0].mxu0
        %v540 = vadd.f32 0.0, %v539
        %v541 = vpop.f32.mrb[0].mxu0
        %v542 = vpop.f32.mrb[0].mxu0
        %v543 = vadd.f32 0.0, %v542
        %v544 = vpop.f32.mrb[0].mxu0
        %545 = vmatprep.mubr.bf16.mxu0 0
        %546 = vmatmul.mubr.bf16.gmra.mrb[0].mxu0 %v372
        %v547 = vpop.f32.mrb[0].mxu0
        %v548 = vadd.f32 0.0, %v547
        %v549 = vpop.f32.mrb[0].mxu0
        %v550 = vpop.f32.mrb[0].mxu0
        %v551 = vadd.f32 0.0, %v550
        %v552 = vpop.f32.mrb[0].mxu0
        %553 = vmatprep.mubr.bf16.mxu0 0
        %554 = vmatmul.mubr.bf16.gmra.mrb[0].mxu0 %v373
        %v555 = vpop.f32.mrb[0].mxu0
        %v556 = vadd.f32 0.0, %v555
        %v557 = vpop.f32.mrb[0].mxu0
        %v558 = vpop.f32.mrb[0].mxu0
        %v559 = vadd.f32 0.0, %v558
        %v560 = vpop.f32.mrb[0].mxu0
        %561 = vmatprep.mubr.bf16.mxu0 0
        %562 = vmatmul.mubr.bf16.gmra.mrb[0].mxu0 %v374
        %v563 = vpop.f32.mrb[0].mxu0
        %v564 = vadd.f32 0.0, %v563
        %v565 = vpop.f32.mrb[0].mxu0
        %v566 = vpop.f32.mrb[0].mxu0
        %v567 = vadd.f32 0.0, %v566
        %v568 = vpop.f32.mrb[0].mxu0
        %569 = vmatprep.mubr.bf16.mxu0 0
        %570 = vmatmul.mubr.bf16.gmra.mrb[0].mxu0 %v375
        %v571 = vpop.f32.mrb[0].mxu0
        %v572 = vadd.f32 0.0, %v571
        %v573 = vpop.f32.mrb[0].mxu0
        %v574 = vpop.f32.mrb[0].mxu0
        %v575 = vadd.f32 0.0, %v574
        %v576 = vpop.f32.mrb[0].mxu0
        %577 = vmatprep.mubr.bf16.mxu0 0
        %578 = vmatmul.mubr.bf16.gmra.mrb[0].mxu0 %v376
        %v579 = vpop.f32.mrb[0].mxu0
        %v580 = vadd.f32 0.0, %v579
        %v581 = vpop.f32.mrb[0].mxu0
        %v582 = vpop.f32.mrb[0].mxu0
        %v583 = vadd.f32 0.0, %v582
        %v584 = vpop.f32.mrb[0].mxu0
        %585 = vmatprep.mubr.bf16.mxu0 0
        %586 = vmatmul.mubr.bf16.gmra.mrb[0].mxu0 %v377
        %v587 = vpop.f32.mrb[0].mxu0
        %v588 = vadd.f32 0.0, %v587
        %v589 = vpop.f32.mrb[0].mxu0
        %v590 = vpop.f32.mrb[0].mxu0
        %v591 = vadd.f32 0.0, %v590
        %v592 = vpop.f32.mrb[0].mxu0
        %593 = vmatprep.mubr.bf16.mxu0 0
        %594 = vmatmul.mubr.bf16.gmra.mrb[0].mxu0 %v378
        %v595 = vpop.f32.mrb[0].mxu0
        %v596 = vadd.f32 0.0, %v595
        %v597 = vpop.f32.mrb[0].mxu0
        %v598 = vpop.f32.mrb[0].mxu0
        %v599 = vadd.f32 0.0, %v598
        %v600 = vpop.f32.mrb[0].mxu0
        %601 = vmatprep.mubr.bf16.mxu0 0
        %602 = vmatmul.mubr.bf16.gmra.mrb[0].mxu0 %v379
        %v603 = vpop.f32.mrb[0].mxu0
        %v604 = vadd.f32 0.0, %v603
        %v605 = vpop.f32.mrb[0].mxu0
        %v606 = vpop.f32.mrb[0].mxu0
        %v607 = vadd.f32 0.0, %v606
        %v608 = vpop.f32.mrb[0].mxu0
        %609 = vmatprep.mubr.bf16.mxu0 0
        %610 = vmatmul.mubr.bf16.gmra.mrb[0].mxu0 %v380
        %v611 = vpop.f32.mrb[0].mxu0
        %v612 = vadd.f32 0.0, %v611
        %v613 = vpop.f32.mrb[0].mxu0
        %v614 = vpop.f32.mrb[0].mxu0
        %v615 = vadd.f32 0.0, %v614
        %v616 = vpop.f32.mrb[0].mxu0
        %617 = vdwg.mxu0
        %618 = vmatprep.subr.bf16.mxu0 0
        %619 = vmatpush1.bf16.msra.mxu0 %v473
        %620 = vmatprep.subr.bf16.mxu0 0
        %621 = vmatpush1.bf16.msra.mxu0 %v474
        %622 = vmatprep.subr.bf16.mxu0 0
        %623 = vmatpush1.bf16.msra.mxu0 %v475
        %624 = vmatprep.subr.bf16.mxu0 0
        %625 = vmatpush1.bf16.msra.mxu0 %v476
        %626 = vmatprep.subr.bf16.mxu0 0
        %627 = vmatpush1.bf16.msra.mxu0 %v477
        %628 = vmatprep.subr.bf16.mxu0 0
        %629 = vmatpush1.bf16.msra.mxu0 %v478
        %630 = vmatprep.subr.bf16.mxu0 0
        %631 = vmatpush1.bf16.msra.mxu0 %v479
        %632 = vmatprep.subr.bf16.mxu0 0
        %633 = vmatpush1.bf16.msra.mxu0 %v480
        %634 = vmatprep.subr.bf16.mxu0 0
        %635 = vmatpush1.bf16.msra.mxu0 0
        %636 = vmatprep.subr.bf16.mxu0 0
        %637 = vmatpush1.bf16.msra.mxu0 0
        %638 = vmatprep.subr.bf16.mxu0 0
        %639 = vmatpush1.bf16.msra.mxu0 0
        %640 = vmatprep.subr.bf16.mxu0 0
        %641 = vmatpush1.bf16.msra.mxu0 0
        %642 = vmatprep.subr.bf16.mxu0 0
        %643 = vmatpush1.bf16.msra.mxu0 0
        %644 = vmatprep.subr.bf16.mxu0 0
        %645 = vmatpush1.bf16.msra.mxu0 0
        %646 = vmatprep.subr.bf16.mxu0 0
        %647 = vmatpush1.bf16.msra.mxu0 0
        %648 = vmatprep.subr.bf16.mxu0 0
        %649 = vmatpush1.bf16.msra.mxu0 0
        %650 = vmatprep.mubr.bf16.mxu0 0
        %651 = vmatmul.mubr.bf16.gmra.mrb[0].mxu0 %v309
        %v652 = vpop.f32.mrb[0].mxu0
        %v653 = vadd.f32 %v524, %v652
        %v654 = vpop.f32.mrb[0].mxu0
        %v655 = vpop.f32.mrb[0].mxu0
        %v656 = vadd.f32 %v527, %v655
        %v657 = vpop.f32.mrb[0].mxu0
        %658 = vmatprep.mubr.bf16.mxu0 0
        %659 = vmatmul.mubr.bf16.gmra.mrb[0].mxu0 %v310
        %v660 = vpop.f32.mrb[0].mxu0
        %v661 = vadd.f32 %v532, %v660
        %v662 = vpop.f32.mrb[0].mxu0
        %v663 = vpop.f32.mrb[0].mxu0
        %v664 = vadd.f32 %v535, %v663
        %v665 = vpop.f32.mrb[0].mxu0
        %666 = vmatprep.mubr.bf16.mxu0 0
        %667 = vmatmul.mubr.bf16.gmra.mrb[0].mxu0 %v311
        %v668 = vpop.f32.mrb[0].mxu0
        %v669 = vadd.f32 %v540, %v668
        %v670 = vpop.f32.mrb[0].mxu0
        %v671 = vpop.f32.mrb[0].mxu0
        %v672 = vadd.f32 %v543, %v671
        %v673 = vpop.f32.mrb[0].mxu0
        %674 = vmatprep.mubr.bf16.mxu0 0
        %675 = vmatmul.mubr.bf16.gmra.mrb[0].mxu0 %v312
        %v676 = vpop.f32.mrb[0].mxu0
        %v677 = vadd.f32 %v548, %v676
        %v678 = vpop.f32.mrb[0].mxu0
        %v679 = vpop.f32.mrb[0].mxu0
        %v680 = vadd.f32 %v551, %v679
        %v681 = vpop.f32.mrb[0].mxu0
        %682 = vmatprep.mubr.bf16.mxu0 0
        %683 = vmatmul.mubr.bf16.gmra.mrb[0].mxu0 %v313
        %v684 = vpop.f32.mrb[0].mxu0
        %v685 = vadd.f32 %v556, %v684
        %v686 = vpop.f32.mrb[0].mxu0
        %v687 = vpop.f32.mrb[0].mxu0
        %v688 = vadd.f32 %v559, %v687
        %v689 = vpop.f32.mrb[0].mxu0
        %690 = vmatprep.mubr.bf16.mxu0 0
        %691 = vmatmul.mubr.bf16.gmra.mrb[0].mxu0 %v314
        %v692 = vpop.f32.mrb[0].mxu0
        %v693 = vadd.f32 %v564, %v692
        %v694 = vpop.f32.mrb[0].mxu0
        %v695 = vpop.f32.mrb[0].mxu0
        %v696 = vadd.f32 %v567, %v695
        %v697 = vpop.f32.mrb[0].mxu0
        %698 = vmatprep.mubr.bf16.mxu0 0
        %699 = vmatmul.mubr.bf16.gmra.mrb[0].mxu0 %v315
        %v700 = vpop.f32.mrb[0].mxu0
        %v701 = vadd.f32 %v572, %v700
        %v702 = vpop.f32.mrb[0].mxu0
        %v703 = vpop.f32.mrb[0].mxu0
        %v704 = vadd.f32 %v575, %v703
        %v705 = vpop.f32.mrb[0].mxu0
        %706 = vmatprep.mubr.bf16.mxu0 0
        %707 = vmatmul.mubr.bf16.gmra.mrb[0].mxu0 %v316
        %v708 = vpop.f32.mrb[0].mxu0
        %v709 = vadd.f32 %v580, %v708
        %v710 = vpop.f32.mrb[0].mxu0
        %v711 = vpop.f32.mrb[0].mxu0
        %v712 = vadd.f32 %v583, %v711
        %v713 = vpop.f32.mrb[0].mxu0
        %714 = vmatprep.mubr.bf16.mxu0 0
        %715 = vmatmul.mubr.bf16.gmra.mrb[0].mxu0 %v317
        %v716 = vpop.f32.mrb[0].mxu0
        %v717 = vadd.f32 %v588, %v716
        %v718 = vpop.f32.mrb[0].mxu0
        %v719 = vpop.f32.mrb[0].mxu0
        %v720 = vadd.f32 %v591, %v719
        %v721 = vpop.f32.mrb[0].mxu0
        %722 = vmatprep.mubr.bf16.mxu0 0
        %723 = vmatmul.mubr.bf16.gmra.mrb[0].mxu0 %v318
        %v724 = vpop.f32.mrb[0].mxu0
        %v725 = vadd.f32 %v596, %v724
        %v726 = vpop.f32.mrb[0].mxu0
        %v727 = vpop.f32.mrb[0].mxu0
        %v728 = vadd.f32 %v599, %v727
        %v729 = vpop.f32.mrb[0].mxu0
        %730 = vmatprep.mubr.bf16.mxu0 0
        %731 = vmatmul.mubr.bf16.gmra.mrb[0].mxu0 %v319
        %v732 = vpop.f32.mrb[0].mxu0
        %v733 = vadd.f32 %v604, %v732
        %v734 = vpop.f32.mrb[0].mxu0
        %v735 = vpop.f32.mrb[0].mxu0
        %v736 = vadd.f32 %v607, %v735
        %v737 = vpop.f32.mrb[0].mxu0
        %738 = vmatprep.mubr.bf16.mxu0 0
        %739 = vmatmul.mubr.bf16.gmra.mrb[0].mxu0 %v320
        %v740 = vpop.f32.mrb[0].mxu0
        %v741 = vadd.f32 %v612, %v740
        %v742 = vpop.f32.mrb[0].mxu0
        %v743 = vpop.f32.mrb[0].mxu0
        %v744 = vadd.f32 %v615, %v743
        %v745 = vpop.f32.mrb[0].mxu0
        %746 = vdwg.mxu0
        %747 = vmatprep.subr.bf16.mxu0 0
        %748 = vmatpush1.bf16.msra.mxu0 %v473
        %749 = vmatprep.subr.bf16.mxu0 0
        %750 = vmatpush1.bf16.msra.mxu0 %v474
        %751 = vmatprep.subr.bf16.mxu0 0
        %752 = vmatpush1.bf16.msra.mxu0 %v475
        %753 = vmatprep.subr.bf16.mxu0 0
        %754 = vmatpush1.bf16.msra.mxu0 %v476
        %755 = vmatprep.subr.bf16.mxu0 0
        %756 = vmatpush1.bf16.msra.mxu0 %v477
        %757 = vmatprep.subr.bf16.mxu0 0
        %758 = vmatpush1.bf16.msra.mxu0 %v478
        %759 = vmatprep.subr.bf16.mxu0 0
        %760 = vmatpush1.bf16.msra.mxu0 %v479
        %761 = vmatprep.subr.bf16.mxu0 0
        %762 = vmatpush1.bf16.msra.mxu0 %v480
        %763 = vmatprep.subr.bf16.mxu0 0
        %764 = vmatpush1.bf16.msra.mxu0 0
        %765 = vmatprep.subr.bf16.mxu0 0
        %766 = vmatpush1.bf16.msra.mxu0 0
        %767 = vmatprep.subr.bf16.mxu0 0
        %768 = vmatpush1.bf16.msra.mxu0 0
        %769 = vmatprep.subr.bf16.mxu0 0
        %770 = vmatpush1.bf16.msra.mxu0 0
        %771 = vmatprep.subr.bf16.mxu0 0
        %772 = vmatpush1.bf16.msra.mxu0 0
        %773 = vmatprep.subr.bf16.mxu0 0
        %774 = vmatpush1.bf16.msra.mxu0 0
        %775 = vmatprep.subr.bf16.mxu0 0
        %776 = vmatpush1.bf16.msra.mxu0 0
        %777 = vmatprep.subr.bf16.mxu0 0
        %778 = vmatpush1.bf16.msra.mxu0 0
        %779 = vmatprep.mubr.bf16.mxu0 0
        %780 = vmatmul.mubr.bf16.gmra.mrb[0].mxu0 %v429
        %v781 = vpop.f32.mrb[0].mxu0
        %v782 = vadd.f32 0.0, %v781
        %v783 = vpop.f32.mrb[0].mxu0
        %v784 = vpop.f32.mrb[0].mxu0
        %v785 = vadd.f32 0.0, %v784
        %v786 = vpop.f32.mrb[0].mxu0
        %787 = vmatprep.mubr.bf16.mxu0 0
        %788 = vmatmul.mubr.bf16.gmra.mrb[0].mxu0 %v430
        %v789 = vpop.f32.mrb[0].mxu0
        %v790 = vadd.f32 0.0, %v789
        %v791 = vpop.f32.mrb[0].mxu0
        %v792 = vpop.f32.mrb[0].mxu0
        %v793 = vadd.f32 0.0, %v792
        %v794 = vpop.f32.mrb[0].mxu0
        %795 = vmatprep.mubr.bf16.mxu0 0
        %796 = vmatmul.mubr.bf16.gmra.mrb[0].mxu0 %v431
        %v797 = vpop.f32.mrb[0].mxu0
        %v798 = vadd.f32 0.0, %v797
        %v799 = vpop.f32.mrb[0].mxu0
        %v800 = vpop.f32.mrb[0].mxu0
        %v801 = vadd.f32 0.0, %v800
        %v802 = vpop.f32.mrb[0].mxu0
        %803 = vmatprep.mubr.bf16.mxu0 0
        %804 = vmatmul.mubr.bf16.gmra.mrb[0].mxu0 %v432
        %v805 = vpop.f32.mrb[0].mxu0
        %v806 = vadd.f32 0.0, %v805
        %v807 = vpop.f32.mrb[0].mxu0
        %v808 = vpop.f32.mrb[0].mxu0
        %v809 = vadd.f32 0.0, %v808
        %v810 = vpop.f32.mrb[0].mxu0
        %811 = vmatprep.mubr.bf16.mxu0 0
        %812 = vmatmul.mubr.bf16.gmra.mrb[0].mxu0 %v433
        %v813 = vpop.f32.mrb[0].mxu0
        %v814 = vadd.f32 0.0, %v813
        %v815 = vpop.f32.mrb[0].mxu0
        %v816 = vpop.f32.mrb[0].mxu0
        %v817 = vadd.f32 0.0, %v816
        %v818 = vpop.f32.mrb[0].mxu0
        %819 = vmatprep.mubr.bf16.mxu0 0
        %820 = vmatmul.mubr.bf16.gmra.mrb[0].mxu0 %v434
        %v821 = vpop.f32.mrb[0].mxu0
        %v822 = vadd.f32 0.0, %v821
        %v823 = vpop.f32.mrb[0].mxu0
        %v824 = vpop.f32.mrb[0].mxu0
        %v825 = vadd.f32 0.0, %v824
        %v826 = vpop.f32.mrb[0].mxu0
        %827 = vmatprep.mubr.bf16.mxu0 0
        %828 = vmatmul.mubr.bf16.gmra.mrb[0].mxu0 %v435
        %v829 = vpop.f32.mrb[0].mxu0
        %v830 = vadd.f32 0.0, %v829
        %v831 = vpop.f32.mrb[0].mxu0
        %v832 = vpop.f32.mrb[0].mxu0
        %v833 = vadd.f32 0.0, %v832
        %v834 = vpop.f32.mrb[0].mxu0
        %835 = vmatprep.mubr.bf16.mxu0 0
        %836 = vmatmul.mubr.bf16.gmra.mrb[0].mxu0 %v436
        %v837 = vpop.f32.mrb[0].mxu0
        %v838 = vadd.f32 0.0, %v837
        %v839 = vpop.f32.mrb[0].mxu0
        %v840 = vpop.f32.mrb[0].mxu0
        %v841 = vadd.f32 0.0, %v840
        %v842 = vpop.f32.mrb[0].mxu0
        %843 = vmatprep.mubr.bf16.mxu0 0
        %844 = vmatmul.mubr.bf16.gmra.mrb[0].mxu0 %v437
        %v845 = vpop.f32.mrb[0].mxu0
        %v846 = vadd.f32 0.0, %v845
        %v847 = vpop.f32.mrb[0].mxu0
        %v848 = vpop.f32.mrb[0].mxu0
        %v849 = vadd.f32 0.0, %v848
        %v850 = vpop.f32.mrb[0].mxu0
        %851 = vmatprep.mubr.bf16.mxu0 0
        %852 = vmatmul.mubr.bf16.gmra.mrb[0].mxu0 %v438
        %v853 = vpop.f32.mrb[0].mxu0
        %v854 = vadd.f32 0.0, %v853
        %v855 = vpop.f32.mrb[0].mxu0
        %v856 = vpop.f32.mrb[0].mxu0
        %v857 = vadd.f32 0.0, %v856
        %v858 = vpop.f32.mrb[0].mxu0
        %859 = vmatprep.mubr.bf16.mxu0 0
        %860 = vmatmul.mubr.bf16.gmra.mrb[0].mxu0 %v439
        %v861 = vpop.f32.mrb[0].mxu0
        %v862 = vadd.f32 0.0, %v861
        %v863 = vpop.f32.mrb[0].mxu0
        %v864 = vpop.f32.mrb[0].mxu0
        %v865 = vadd.f32 0.0, %v864
        %v866 = vpop.f32.mrb[0].mxu0
        %867 = vmatprep.mubr.bf16.mxu0 0
        %868 = vmatmul.mubr.bf16.gmra.mrb[0].mxu0 %v440
        %v869 = vpop.f32.mrb[0].mxu0
        %v870 = vadd.f32 0.0, %v869
        %v871 = vpop.f32.mrb[0].mxu0
        %v872 = vpop.f32.mrb[0].mxu0
        %v873 = vadd.f32 0.0, %v872
        %v874 = vpop.f32.mrb[0].mxu0
        %875 = vdwg.mxu0
        %v876 = vadd.f32 %v653, %v782
        %v877 = vadd.f32 %v656, %v785
        %v878 = vadd.f32 %v661, %v790
        %v879 = vadd.f32 %v664, %v793
        %v880 = vadd.f32 %v669, %v798
        %v881 = vadd.f32 %v672, %v801
        %v882 = vadd.f32 %v677, %v806
        %v883 = vadd.f32 %v680, %v809
        %v884 = vadd.f32 %v685, %v814
        %v885 = vadd.f32 %v688, %v817
        %v886 = vadd.f32 %v693, %v822
        %v887 = vadd.f32 %v696, %v825
        %v888 = vadd.f32 %v701, %v830
        %v889 = vadd.f32 %v704, %v833
        %v890 = vadd.f32 %v709, %v838
        %v891 = vadd.f32 %v712, %v841
        %v892 = vadd.f32 %v717, %v846
        %v893 = vadd.f32 %v720, %v849
        %v894 = vadd.f32 %v725, %v854
        %v895 = vadd.f32 %v728, %v857
        %v896 = vadd.f32 %v733, %v862
        %v897 = vadd.f32 %v736, %v865
        %v898 = vadd.f32 %v741, %v870
        %v899 = vadd.f32 %v744, %v873
        %vm900 = vcmp.gt.f32.partialorder %v876, 0.0
        %vm901 = vcmp.gt.f32.partialorder %v877, 0.0
        %vm902 = vcmp.gt.f32.partialorder %v878, 0.0
        %vm903 = vcmp.gt.f32.partialorder %v879, 0.0
        %vm904 = vcmp.gt.f32.partialorder %v880, 0.0
        %vm905 = vcmp.gt.f32.partialorder %v881, 0.0
        %vm906 = vcmp.gt.f32.partialorder %v882, 0.0
        %vm907 = vcmp.gt.f32.partialorder %v883, 0.0
        %vm908 = vcmp.gt.f32.partialorder %v884, 0.0
        %vm909 = vcmp.gt.f32.partialorder %v885, 0.0
        %vm910 = vcmp.gt.f32.partialorder %v886, 0.0
        %vm911 = vcmp.gt.f32.partialorder %v887, 0.0
        %vm912 = vcmp.gt.f32.partialorder %v888, 0.0
        %vm913 = vcmp.gt.f32.partialorder %v889, 0.0
        %vm914 = vcmp.gt.f32.partialorder %v890, 0.0
        %vm915 = vcmp.gt.f32.partialorder %v891, 0.0
        %vm916 = vcmp.gt.f32.partialorder %v892, 0.0
        %vm917 = vcmp.gt.f32.partialorder %v893, 0.0
        %vm918 = vcmp.gt.f32.partialorder %v894, 0.0
        %vm919 = vcmp.gt.f32.partialorder %v895, 0.0
        %vm920 = vcmp.gt.f32.partialorder %v896, 0.0
        %vm921 = vcmp.gt.f32.partialorder %v897, 0.0
        %vm922 = vcmp.gt.f32.partialorder %v898, 0.0
        %vm923 = vcmp.gt.f32.partialorder %v899, 0.0
        %v924 = vmul.f32 %v876, 0.2
        %v925 = vmul.f32 %v877, 0.2
        %v926 = vmul.f32 %v878, 0.2
        %v927 = vmul.f32 %v879, 0.2
        %v928 = vmul.f32 %v880, 0.2
        %v929 = vmul.f32 %v881, 0.2
        %v930 = vmul.f32 %v882, 0.2
        %v931 = vmul.f32 %v883, 0.2
        %v932 = vmul.f32 %v884, 0.2
        %v933 = vmul.f32 %v885, 0.2
        %v934 = vmul.f32 %v886, 0.2
        %v935 = vmul.f32 %v887, 0.2
        %v936 = vmul.f32 %v888, 0.2
        %v937 = vmul.f32 %v889, 0.2
        %v938 = vmul.f32 %v890, 0.2
        %v939 = vmul.f32 %v891, 0.2
        %v940 = vmul.f32 %v892, 0.2
        %v941 = vmul.f32 %v893, 0.2
        %v942 = vmul.f32 %v894, 0.2
        %v943 = vmul.f32 %v895, 0.2
        %v944 = vmul.f32 %v896, 0.2
        %v945 = vmul.f32 %v897, 0.2
        %v946 = vmul.f32 %v898, 0.2
        %v947 = vmul.f32 %v899, 0.2
        %v948 = vsel %vm900, %v876, %v924
        %v949 = vsel %vm901, %v877, %v925
        %v950 = vsel %vm902, %v878, %v926
        %v951 = vsel %vm903, %v879, %v927
        %v952 = vsel %vm904, %v880, %v928
        %v953 = vsel %vm905, %v881, %v929
        %v954 = vsel %vm906, %v882, %v930
        %v955 = vsel %vm907, %v883, %v931
        %v956 = vsel %vm908, %v884, %v932
        %v957 = vsel %vm909, %v885, %v933
        %v958 = vsel %vm910, %v886, %v934
        %v959 = vsel %vm911, %v887, %v935
        %v960 = vsel %vm912, %v888, %v936
        %v961 = vsel %vm913, %v889, %v937
        %v962 = vsel %vm914, %v890, %v938
        %v963 = vsel %vm915, %v891, %v939
        %v964 = vsel %vm916, %v892, %v940
        %v965 = vsel %vm917, %v893, %v941
        %v966 = vsel %vm918, %v894, %v942
        %v967 = vsel %vm919, %v895, %v943
        %v968 = vsel %vm920, %v896, %v944
        %v969 = vsel %vm921, %v897, %v945
        %v970 = vsel %vm922, %v898, %v946
        %v971 = vsel %vm923, %v899, %v947
        %v972 = vmax.f32 %v948, %v956
        %v973 = vmax.f32 %v972, %v964
        %v974 = vmax.f32 %v949, %v957
        %v975 = vmax.f32 %v974, %v965
        %v976 = vmax.f32 %v950, %v958
        %v977 = vmax.f32 %v976, %v966
        %v978 = vmax.f32 %v951, %v959
        %v979 = vmax.f32 %v978, %v967
        %v980 = vmax.f32 %v952, %v960
        %v981 = vmax.f32 %v980, %v968
        %v982 = vmax.f32 %v953, %v961
        %v983 = vmax.f32 %v982, %v969
        %v984 = vmax.f32 %v954, %v962
        %v985 = vmax.f32 %v984, %v970
        %v986 = vmax.f32 %v955, %v963
        %v987 = vmax.f32 %v986, %v971
        %v988 = vsub.f32 %v948, %v973
        %v989 = vsub.f32 %v949, %v975
        %v990 = vsub.f32 %v950, %v977
        %v991 = vsub.f32 %v951, %v979
        %v992 = vsub.f32 %v952, %v981
        %v993 = vsub.f32 %v953, %v983
        %v994 = vsub.f32 %v954, %v985
        %v995 = vsub.f32 %v955, %v987
        %v996 = vsub.f32 %v956, %v973
        %v997 = vsub.f32 %v957, %v975
        %v998 = vsub.f32 %v958, %v977
        %v999 = vsub.f32 %v959, %v979
        %v1000 = vsub.f32 %v960, %v981
        %v1001 = vsub.f32 %v961, %v983
        %v1002 = vsub.f32 %v962, %v985
        %v1003 = vsub.f32 %v963, %v987
        %v1004 = vsub.f32 %v964, %v973
        %v1005 = vsub.f32 %v965, %v975
        %v1006 = vsub.f32 %v966, %v977
        %v1007 = vsub.f32 %v967, %v979
        %v1008 = vsub.f32 %v968, %v981
        %v1009 = vsub.f32 %v969, %v983
        %v1010 = vsub.f32 %v970, %v985
        %v1011 = vsub.f32 %v971, %v987
        %v1012 = vmul.f32 %v988, 1.442695
        %v1013 = vpow.pop %v1012
        %v1014 = vmul.f32 %v989, 1.442695
        %v1015 = vpow.pop %v1014
        %v1016 = vmul.f32 %v990, 1.442695
        %v1017 = vpow.pop %v1016
        %v1018 = vmul.f32 %v991, 1.442695
        %v1019 = vpow.pop %v1018
        %v1020 = vmul.f32 %v992, 1.442695
        %v1021 = vpow.pop %v1020
        %v1022 = vmul.f32 %v993, 1.442695
        %v1023 = vpow.pop %v1022
        %v1024 = vmul.f32 %v994, 1.442695
        %v1025 = vpow.pop %v1024
        %v1026 = vmul.f32 %v995, 1.442695
        %v1027 = vpow.pop %v1026
        %v1028 = vmul.f32 %v996, 1.442695
        %v1029 = vpow.pop %v1028
        %v1030 = vmul.f32 %v997, 1.442695
        %v1031 = vpow.pop %v1030
        %v1032 = vmul.f32 %v998, 1.442695
        %v1033 = vpow.pop %v1032
        %v1034 = vmul.f32 %v999, 1.442695
        %v1035 = vpow.pop %v1034
        %v1036 = vmul.f32 %v1000, 1.442695
        %v1037 = vpow.pop %v1036
        %v1038 = vmul.f32 %v1001, 1.442695
        %v1039 = vpow.pop %v1038
        %v1040 = vmul.f32 %v1002, 1.442695
        %v1041 = vpow.pop %v1040
        %v1042 = vmul.f32 %v1003, 1.442695
        %v1043 = vpow.pop %v1042
        %v1044 = vmul.f32 %v1004, 1.442695
        %v1045 = vpow.pop %v1044
        %v1046 = vmul.f32 %v1005, 1.442695
        %v1047 = vpow.pop %v1046
        %v1048 = vmul.f32 %v1006, 1.442695
        %v1049 = vpow.pop %v1048
        %v1050 = vmul.f32 %v1007, 1.442695
        %v1051 = vpow.pop %v1050
        %v1052 = vmul.f32 %v1008, 1.442695
        %v1053 = vpow.pop %v1052
        %v1054 = vmul.f32 %v1009, 1.442695
        %v1055 = vpow.pop %v1054
        %v1056 = vmul.f32 %v1010, 1.442695
        %v1057 = vpow.pop %v1056
        %v1058 = vmul.f32 %v1011, 1.442695
        %v1059 = vpow.pop %v1058
        %v1060 = vadd.f32 %v1013, %v1029
        %v1061 = vadd.f32 %v1060, %v1045
        %v1062 = vadd.f32 %v1015, %v1031
        %v1063 = vadd.f32 %v1062, %v1047
        %v1064 = vadd.f32 %v1017, %v1033
        %v1065 = vadd.f32 %v1064, %v1049
        %v1066 = vadd.f32 %v1019, %v1035
        %v1067 = vadd.f32 %v1066, %v1051
        %v1068 = vadd.f32 %v1021, %v1037
        %v1069 = vadd.f32 %v1068, %v1053
        %v1070 = vadd.f32 %v1023, %v1039
        %v1071 = vadd.f32 %v1070, %v1055
        %v1072 = vadd.f32 %v1025, %v1041
        %v1073 = vadd.f32 %v1072, %v1057
        %v1074 = vadd.f32 %v1027, %v1043
        %v1075 = vadd.f32 %v1074, %v1059
        %v1076 = vrcp.pop %v1061
        %v1077 = vrcp.pop %v1063
        %v1078 = vrcp.pop %v1065
        %v1079 = vrcp.pop %v1067
        %v1080 = vrcp.pop %v1069
        %v1081 = vrcp.pop %v1071
        %v1082 = vrcp.pop %v1073
        %v1083 = vrcp.pop %v1075
        %v1084 = vmul.f32 %v1013, %v1076
        %v1085 = vmul.f32 %v1015, %v1077
        %v1086 = vmul.f32 %v1017, %v1078
        %v1087 = vmul.f32 %v1019, %v1079
        %v1088 = vmul.f32 %v1021, %v1080
        %v1089 = vmul.f32 %v1023, %v1081
        %v1090 = vmul.f32 %v1025, %v1082
        %v1091 = vmul.f32 %v1027, %v1083
        %v1092 = vmul.f32 %v1029, %v1076
        %v1093 = vmul.f32 %v1031, %v1077
        %v1094 = vmul.f32 %v1033, %v1078
        %v1095 = vmul.f32 %v1035, %v1079
        %v1096 = vmul.f32 %v1037, %v1080
        %v1097 = vmul.f32 %v1039, %v1081
        %v1098 = vmul.f32 %v1041, %v1082
        %v1099 = vmul.f32 %v1043, %v1083
        %v1100 = vmul.f32 %v1045, %v1076
        %v1101 = vmul.f32 %v1047, %v1077
        %v1102 = vmul.f32 %v1049, %v1078
        %v1103 = vmul.f32 %v1051, %v1079
        %v1104 = vmul.f32 %v1053, %v1080
        %v1105 = vmul.f32 %v1055, %v1081
        %v1106 = vmul.f32 %v1057, %v1082
        %v1107 = vmul.f32 %v1059, %v1083
        %v1108 = vmul.f32 %v244, %v1084
        %v1109 = vmul.f32 %v245, %v1085
        %v1110 = vmul.f32 %v246, %v1086
        %v1111 = vmul.f32 %v247, %v1087
        %v1112 = vmul.f32 %v248, %v1088
        %v1113 = vmul.f32 %v249, %v1089
        %v1114 = vmul.f32 %v250, %v1090
        %v1115 = vmul.f32 %v251, %v1091
        %v1116 = vmul.f32 %v252, %v1092
        %v1117 = vmul.f32 %v253, %v1093
        %v1118 = vmul.f32 %v254, %v1094
        %v1119 = vmul.f32 %v255, %v1095
        %v1120 = vmul.f32 %v256, %v1096
        %v1121 = vmul.f32 %v257, %v1097
        %v1122 = vmul.f32 %v258, %v1098
        %v1123 = vmul.f32 %v259, %v1099
        %v1124 = vmul.f32 %v260, %v1100
        %v1125 = vmul.f32 %v261, %v1101
        %v1126 = vmul.f32 %v262, %v1102
        %v1127 = vmul.f32 %v263, %v1103
        %v1128 = vmul.f32 %v264, %v1104
        %v1129 = vmul.f32 %v265, %v1105
        %v1130 = vmul.f32 %v266, %v1106
        %v1131 = vmul.f32 %v267, %v1107
        %v1132 = vadd.f32 %v1108, %v1116
        %v1133 = vadd.f32 %v1132, %v1124
        %v1134 = vadd.f32 %v1109, %v1117
        %v1135 = vadd.f32 %v1134, %v1125
        %v1136 = vadd.f32 %v1110, %v1118
        %v1137 = vadd.f32 %v1136, %v1126
        %v1138 = vadd.f32 %v1111, %v1119
        %v1139 = vadd.f32 %v1138, %v1127
        %v1140 = vadd.f32 %v1112, %v1120
        %v1141 = vadd.f32 %v1140, %v1128
        %v1142 = vadd.f32 %v1113, %v1121
        %v1143 = vadd.f32 %v1142, %v1129
        %v1144 = vadd.f32 %v1114, %v1122
        %v1145 = vadd.f32 %v1144, %v1130
        %v1146 = vadd.f32 %v1115, %v1123
        %v1147 = vadd.f32 %v1146, %v1131
        %1148 = vst [vmem:[%s240] sm:$0xff] %v1133
        %1149 = vst [vmem:[%s240 + $0x8] sm:$0xff] %v1135
        %1150 = vst [vmem:[%s240 + $0x10] sm:$0xff] %v1137
        %1151 = vst [vmem:[%s240 + $0x18] sm:$0xff] %v1139
        %1152 = vst [vmem:[%s240 + $0x20] sm:$0xff] %v1141
        %1153 = vst [vmem:[%s240 + $0x28] sm:$0xff] %v1143
        %1154 = vst [vmem:[%s240 + $0x30] sm:$0xff] %v1145
        %1155 = vst [vmem:[%s240 + $0x38] sm:$0xff] %v1147
        %s1156 = sand.u32 %s97, 1
        %s1157 = scalar_lea.sflag [#allocation4], %s1156
        %s1158 = sand.u32 %s97, 1
        %s1159 = smul.addr %s1158, 64
        %s1160 = scalar_lea.vmem [#allocation8], %s1159
        // Predicated region
        $region45: #{tpu_custom_call.1} parent=31 // pred_check
          %p1161 = pneg %p107
        $region46: #{tpu_custom_call.1} parent=31 // pred_check_branch
          %1163 = sbr.rel (%p1161) target = $region48
        $region47: #{tpu_custom_call.1} parent=31 // pred_region
          %s1164 = smul.u32 8, %s21
          %s1166 = ssub.s32 1024, 1024
          %1167 = vsyncadd %s1157, %s1166
          %s1168 = smul.addr %s1164, 128
          %s1169 = scalar_lea.hbm %s3, %s1168
          %s1170 = sshll.u32 %s1160, 4
          %s1171 = int_to_ptr.vmem [resolvable:$true] %s1170
          %1176 = dma.vmem_to_hbm [thread:$0]  %s1171, 1024, %s1169, %s1157, 128, 128, 8
        $region48: #{tpu_custom_call.1} parent=31 // pred_fallthru
          _
      $region32: #{tpu_custom_call.1} parent=5 // pred_fallthru
        _
      %p1177 = scmp.le.s32.totalorder 2, %s16
      // Predicated region
      $region49: #{tpu_custom_call.1} parent=5 // pred_check
        %p1178 = pneg %p1177
      $region50: #{tpu_custom_call.1} parent=5 // pred_check_branch
        %1180 = sbr.rel (%p1178) target = $region52
      $region51: #{tpu_custom_call.1} parent=5 // pred_region
        %s1181 = ssub.s32 %s16, 2
        // Predicated region
        $region53: #{tpu_custom_call.1} parent=51 // pred_check
          %p1182 = pneg %p113
        $region54: #{tpu_custom_call.1} parent=51 // pred_check_branch
          %1184 = sbr.rel (%p1182) target = $region56
        $region55: #{tpu_custom_call.1} parent=51 // pred_region
          %s1185 = sand.u32 %s98, 1
          %s1186 = scalar_lea.sflag [#allocation4], %s1185
          %s1187 = sand.u32 %s98, 1
          %s1188 = smul.addr %s1187, 64
          %s1189 = scalar_lea.vmem [#allocation8], %s1188
          %1190 = dma.done %s1186, 1024
        $region56: #{tpu_custom_call.1} parent=51 // pred_fallthru
          _
      $region52: #{tpu_custom_call.1} parent=5 // pred_fallthru
        _
    $region6: #{tpu_custom_call.1} parent=1 // loop_footer
      %s20 = sadd.s32 1, %s16
    $region7: #{tpu_custom_call.1} parent=1 // loop_footer_branch
      %15 = sbr.rel target = $region3
    $region8: #{tpu_custom_call.1} parent=1 // loop_exit
      _
    %1191 = vsyncpa [#allocation3], 1
    %s1192 = scalar_lea.sflag [#allocation3], 1
    %1193 = vsyncpa %s1192, 1
    %1194 = vsyncpa [#allocation6], 1
    %1195 = vsyncpa [#allocation4], 1
    %s1196 = scalar_lea.sflag [#allocation4], 1
    %1197 = vsyncpa %s1196, 1

</llo_original>
